<compile_context>
chip_gen: v7x
topology: tpu7x:2x2x1
jax: 0.10.0
libtpu: 0.0.40
codegen_flags: <defaults>
</compile_context>

<pallas_src>
import numpy as np
import jax
import jax.numpy as jnp
from jax.experimental import pallas as pl
from jax.experimental.pallas import tpu as pltpu


# ---------------------------------------------------------------------------
# Pallas kernel: one MXU matmul per batch tile, weights resident in VMEM
# ---------------------------------------------------------------------------
def _fused_mixer_kernel(x_ref, w_ref, o_ref):
    # x_ref: (bt, D) bf16   w_ref: (D, D) bf16   o_ref: (bt, D) f32
    o_ref[...] = jnp.dot(
        x_ref[...], w_ref[...], preferred_element_type=jnp.float32
    ).astype(o_ref.dtype)


def _pick_batch_tile(batch, dim, in_itemsize=2, out_itemsize=4,
                     target_tile_bytes=2 << 20, min_steps=8, max_rows=4096):
    """Lane-dense (bt, dim) tile: large enough to amortize the ~0.35 us/step grid
    overhead, small enough to keep >= min_steps grid steps (pipeline depth + v7x
    dual-TensorCore sharding) and to stay inside the per-generation VMEM budget."""
    if batch <= 8:
        return batch                       # full-batch block is always legal
    per_row = dim * (in_itemsize + out_itemsize)
    bt = target_tile_bytes // per_row
    bt = max(8, min(bt, max_rows))
    bt = min(bt, max(8, batch // min_steps))   # keep the grid >= min_steps deep
    return max(8, (bt // 8) * 8)               # sublane-aligned


def fused_mixer_forward(x, w_bf16):
    """x: (B, D) f32, w_bf16: (D, D) folded total matrix (bf16) -> (B, D) f32."""
    batch, dim = x.shape
    assert w_bf16.shape == (dim, dim)
    x_bf16 = x.astype(jnp.bfloat16)            # halves HBM read bytes (memory-bound op)

    bt = _pick_batch_tile(batch, dim)
    grid = (pl.cdiv(batch, bt),)               # ragged last tile handled by Pallas masking

    # VMEM footprint: double-buffered in/out tiles + (double-buffered) weight slab
    # + f32 matmul temporary.  Request it explicitly (v5e default is only 16 MiB),
    # capped well under v7x's 64 MiB physical VMEM.
    needed = (2 * bt * dim * 2) + (2 * bt * dim * 4) + (2 * dim * dim * 2) + (bt * dim * 4)
    vmem_limit = int(min(max(2 * needed + (2 << 20), 32 << 20), 48 << 20))

    cost = pl.CostEstimate(
        flops=2 * batch * dim * dim,
        transcendentals=0,
        bytes_accessed=batch * dim * (2 + 4) + dim * dim * 2,
    )
    return pl.pallas_call(
        _fused_mixer_kernel,
        out_shape=jax.ShapeDtypeStruct((batch, dim), x.dtype),
        grid=grid,
        in_specs=[
            pl.BlockSpec((bt, dim), lambda i: (i, 0)),
            # Constant block index -> weight slab DMA'd once, stays resident in VMEM.
            pl.BlockSpec((dim, dim), lambda i: (0, 0)),
        ],
        out_specs=pl.BlockSpec((bt, dim), lambda i: (i, 0)),
        compiler_params=pltpu.CompilerParams(
            dimension_semantics=("parallel",),
            vmem_limit_bytes=vmem_limit,
        ),
        cost_estimate=cost,
    )(x_bf16, w_bf16)


# ---------------------------------------------------------------------------
# Parameter construction (mirrors BlockLinear_MixerBlock.__init__)
# ---------------------------------------------------------------------------
def make_params(input_dim, block_dim, key):
    assert input_dim % block_dim == 0
    assert 2 ** int(np.log2(block_dim)) == block_dim
    assert 2 ** int(np.log2(input_dim)) == input_dim
    # Integer log (smallest L with block_dim**L >= input_dim): avoids the FP
    # ceil(log/log) off-by-one risk for exact powers.
    num_layers = 1
    while block_dim ** num_layers < input_dim:
        num_layers += 1
    nb = input_dim // block_dim
    weights, gaps = [], []
    for i in range(num_layers):
        key, sub = jax.random.split(key)
        # __init__ uses identity weights; add a small deterministic perturbation
        # so the computation is non-trivial.
        w = jnp.tile(jnp.eye(block_dim, dtype=jnp.float32)[None], (nb, 1, 1))
        w = w + 0.1 * jax.random.normal(sub, (nb, block_dim, block_dim), dtype=jnp.float32)
        weights.append(w)
        gap = block_dim ** i
        if gap * block_dim <= input_dim:
            gaps.append(gap)
        else:
            gaps.append(int(np.ceil(input_dim / block_dim)))
    return weights, gaps


def _apply_layer(y, w_blocks, gap, block_dim):
    """Literal transliteration of one PyTorch layer (pre-perm, block bmm, post-perm)."""
    bs = y.shape[0]
    y = jnp.transpose(y.reshape(bs, -1, block_dim, gap), (0, 1, 3, 2)).reshape(bs, -1)
    xb = jnp.transpose(y.reshape(bs, -1, block_dim), (1, 0, 2))       # (nb, bs, bd)
    yb = jnp.einsum("nbk,nkj->nbj", xb, w_blocks)
    y = jnp.transpose(yb, (1, 0, 2)).reshape(bs, -1)
    y = jnp.transpose(y.reshape(bs, -1, gap, block_dim), (0, 1, 3, 2)).reshape(bs, -1)
    return y


def fold_total_matrix(weights, gaps, block_dim, input_dim):
    """Fold ALL layers (permutations + block-diagonal bmms) into one (D, D) matrix.

    The whole stack is linear, so with the row-vector convention y_out = y_in @ M_total
    we have exactly M_total = forward(eye(D))."""
    m = jnp.eye(input_dim, dtype=jnp.float32)
    for w, g in zip(weights, gaps):
        m = _apply_layer(m, w, g, block_dim)
    return m  # (D, D)


# ---------------------------------------------------------------------------
# Pure-jnp reference (literal transliteration of the PyTorch forward), f32
# ---------------------------------------------------------------------------
def reference(x, weights, gaps, block_dim):
    y = x
    for w, gap in zip(weights, gaps):
        y = _apply_layer(y, w, gap, block_dim)
    return y


if __name__ == "__main__":
    # num_layers = ceil(log_8(128)) = 3, gaps = [1, 8, 16]  (exercises the fallback gap)
    input_dim, block_dim = 128, 8

    key = jax.random.PRNGKey(0)
    kx, kw, kx2 = jax.random.split(key, 3)
    weights, gaps = make_params(input_dim, block_dim, kw)

    # Fold all layers into one dense matrix (once, at build time) and cast to bf16.
    w_total = fold_total_matrix(weights, gaps, block_dim, input_dim)
    w_bf16 = jax.block_until_ready(w_total.astype(jnp.bfloat16))

    fwd = jax.jit(lambda xx: fused_mixer_forward(xx, w_bf16))

    # Case 1: evenly divisible batch -> 8 full (256, 128) tiles, parallel grid.
    x = jax.random.normal(kx, (2048, input_dim), dtype=jnp.float32)
    out = jax.block_until_ready(fwd(x))
    ref = reference(x, weights, gaps, block_dim)
    # bf16 weights/activations with f32 accumulation: loosen tolerance vs. f32 reference.
    np.testing.assert_allclose(np.asarray(out), np.asarray(ref), rtol=5e-2, atol=5e-2)

    # Case 2: ragged batch -> grid = pl.cdiv(batch, bt), masked final tile.
    x2 = jax.random.normal(kx2, (1000, input_dim), dtype=jnp.float32)
    out2 = jax.block_until_ready(fwd(x2))
    ref2 = reference(x2, weights, gaps, block_dim)
    np.testing.assert_allclose(np.asarray(out2), np.asarray(ref2), rtol=5e-2, atol=5e-2)

    print("KERNEL_OK")
</pallas_src>

<mosaic_0001>
module attributes {stable_mosaic.version = 11 : i64} {
  func.func @_fused_mixer_kernel(%arg0: i32, %arg1: memref<256x128xbf16, #tpu.memory_space<vmem>>, %arg2: memref<128x128xbf16, #tpu.memory_space<vmem>>, %arg3: memref<256x128xf32, #tpu.memory_space<vmem>>) attributes {dimension_semantics = [#tpu.dimension_semantics<parallel>], iteration_bounds = array<i64: 8>, scalar_prefetch = 0 : i64, scratch_operands = 0 : i64, tpu.core_type = #tpu.core_type<tc>, window_params = [{transform_indices = @transform_0, window_bounds = array<i64: 256, 128>}, {pipeline_mode = #tpu.pipeline_mode<synchronous>, transform_indices = @transform_1, window_bounds = array<i64: 128, 128>}, {transform_indices = @transform_2, window_bounds = array<i64: 256, 128>}]} {
    %c0 = arith.constant 0 : index
    %c0_0 = arith.constant 0 : index
    %0 = vector.load %arg1[%c0, %c0_0] : memref<256x128xbf16, #tpu.memory_space<vmem>>, vector<256x128xbf16>
    %c0_1 = arith.constant 0 : index
    %c0_2 = arith.constant 0 : index
    %1 = vector.load %arg2[%c0_1, %c0_2] : memref<128x128xbf16, #tpu.memory_space<vmem>>, vector<128x128xbf16>
    %cst = arith.constant dense<0.000000e+00> : vector<256x128xf32>
    %2 = tpu.matmul %0, %1, %cst {dimension_numbers = #tpu.dot_dimension_numbers<[1], [0], [0], [1], [0, 0, 1, 1], [], []>} : vector<256x128xbf16>, vector<128x128xbf16>, vector<256x128xf32> -> vector<256x128xf32>
    %c0_3 = arith.constant 0 : index
    %c0_4 = arith.constant 0 : index
    %3 = vector.load %arg3[%c0_3, %c0_4] : memref<256x128xf32, #tpu.memory_space<vmem>>, vector<256x128xf32>
    tpu.vector_store %arg3[%c0_3, %c0_4], %2 {strides = array<i32>} : memref<256x128xf32, #tpu.memory_space<vmem>>, vector<256x128xf32>,
    return
  }
  func.func @transform_0(%arg0: i32) -> (i32, i32) {
    %c0_i32 = arith.constant 0 : i32
    %c0_i32_0 = arith.constant 0 : i32
    return %arg0, %c0_i32 : i32, i32
  }
  func.func @transform_1(%arg0: i32) -> (i32, i32) {
    %c0_i32 = arith.constant 0 : i32
    %c0_i32_0 = arith.constant 0 : i32
    %c0_i32_1 = arith.constant 0 : i32
    return %c0_i32, %c0_i32_0 : i32, i32
  }
  func.func @transform_2(%arg0: i32) -> (i32, i32) {
    %c0_i32 = arith.constant 0 : i32
    %c0_i32_0 = arith.constant 0 : i32
    return %arg0, %c0_i32 : i32, i32
  }
}

</mosaic_0001>

<llo_original>
// kernel: _lambda_.1
$region0: #{_lambda_.1}
  #allocation0 [shape = 'u32[]', space=smem, size = 0x4, offset = 0x4, fixed_abs, tag = 'smem constant byte address 0x4 - core index']
  #allocation1 [shape = 'u32[144,128]{1,0:T(1,128)}', space=vmem, size = 0x12000, scoped, tag = 'internal scratch']
  %s0 = inlined_call_operand.vmem [shape: bf16[2048,128], index: 0, kind: input, shape index: {}]
  %s1 = inlined_call_operand.vmem [shape: bf16[128,128], index: 1, kind: input, shape index: {}]
  %s2 = inlined_call_operand.hbm [shape: f32[2048,128], index: 2, kind: output, shape index: {}]
  %s3 = sld [smem:[#allocation0]]
  $region41: #{_lambda_.1} parent=0
    _
  %s5 = ssub.s32 1, %s3
  %s6 = scalar_select 0, %s5, %s3
  $region1: #{_lambda_.1} parent=0
    #allocation2 [shape = 'u8[262144]{0}', space=vmem, size = 0x40000, scoped, tag = 'output window, operand 0']
    #allocation3 [shape = 's32[2]{0}', space=sflag, size = 0x8, scoped, tag = 'scoped memory for _lambda_.1']
    %7 = vsyncpa [#allocation3], 0
    %s8 = scalar_lea.sflag [#allocation3], 1
    %9 = vsyncpa %s8, 0
    loop: start=0, step=1, limit=10
    $region2: #{_lambda_.1} parent=1 // loop_pre_header
      _
    $region3: #{_lambda_.1} parent=1 // loop_header
      %s11 = sphi 0, %s15
      %p12 = scmp.ge.s32.totalorder %s11, 10
      %s21 = sphi 0, %s23
      %s24 = sphi 0, %s21
      %s25 = sphi 0, %s24
      %s41 = sphi 0, %s25
      %s45 = sphi 0, %s45
      %s47 = sphi 0, %s45
      %s48 = sphi 0, %s47
      %s62 = sphi 0, %s48
      %s68 = sphi 0, %s70
      %s71 = sphi 0, %s68
      %s72 = sphi 0, %s71
      %s88 = sphi 0, %s72
    $region4: #{_lambda_.1} parent=1 // loop_header_branch
      %14 = sbr.rel (%p12) target = $region8
    $region5: #{_lambda_.1} parent=1 // loop_body
      %s16 = ssub.s32 %s11, 1
      %s17 = ssub.s32 %s11, 2
      %s18 = sadd.s32 %s11, 1
      %s19 = ssub.s32 %s11, %s18
      %p20 = scmp.eq.s32.totalorder %s19, 0
      %s22 = sadd.s32 %s21, 1
      %s23 = scalar_select %p20, %s21, %s22
      %p26 = pneg %p20
      %p27 = scmp.eq.s32.totalorder %s11, 7
      %p28 = por %p26, %p27
      %p29 = scmp.ne.s32.totalorder %s21, %s24
      %p30 = scmp.eq.s32.totalorder %s11, 0
      %p31 = por %p29, %p30
      %p32 = scmp.ne.s32.totalorder %s21, %s24
      %p33 = scmp.eq.s32.totalorder %s16, 7
      %p34 = por %p32, %p33
      %p35 = scmp.ne.s32.totalorder %s24, %s25
      %p36 = scmp.eq.s32.totalorder %s16, 0
      %p37 = por %p35, %p36
      %p38 = scmp.ne.s32.totalorder %s24, %s25
      %p39 = scmp.eq.s32.totalorder %s17, 7
      %p40 = por %p38, %p39
      %p42 = scmp.ne.s32.totalorder %s25, %s41
      %p43 = scmp.eq.s32.totalorder %s17, 0
      %p44 = por %p42, %p43
      %s46 = sadd.s32 %s45, 1
      %p49 = scmp.eq.s32.totalorder %s11, 7
      %p50 = scmp.ne.s32.totalorder %s45, %s47
      %p51 = scmp.eq.s32.totalorder %s11, 0
      %p52 = por %p50, %p51
      %p53 = scmp.ne.s32.totalorder %s45, %s47
      %p54 = scmp.eq.s32.totalorder %s16, 7
      %p55 = por %p53, %p54
      %p56 = scmp.ne.s32.totalorder %s47, %s48
      %p57 = scmp.eq.s32.totalorder %s16, 0
      %p58 = por %p56, %p57
      %p59 = scmp.ne.s32.totalorder %s47, %s48
      %p60 = scmp.eq.s32.totalorder %s17, 7
      %p61 = por %p59, %p60
      %p63 = scmp.ne.s32.totalorder %s48, %s62
      %p64 = scmp.eq.s32.totalorder %s17, 0
      %p65 = por %p63, %p64
      %s66 = ssub.s32 %s11, %s18
      %p67 = scmp.eq.s32.totalorder %s66, 0
      %s69 = sadd.s32 %s68, 1
      %s70 = scalar_select %p67, %s68, %s69
      %p73 = pneg %p67
      %p74 = scmp.eq.s32.totalorder %s11, 7
      %p75 = por %p73, %p74
      %p76 = scmp.ne.s32.totalorder %s68, %s71
      %p77 = scmp.eq.s32.totalorder %s11, 0
      %p78 = por %p76, %p77
      %p79 = scmp.ne.s32.totalorder %s68, %s71
      %p80 = scmp.eq.s32.totalorder %s16, 7
      %p81 = por %p79, %p80
      %p82 = scmp.ne.s32.totalorder %s71, %s72
      %p83 = scmp.eq.s32.totalorder %s16, 0
      %p84 = por %p82, %p83
      %p85 = scmp.ne.s32.totalorder %s71, %s72
      %p86 = scmp.eq.s32.totalorder %s17, 7
      %p87 = por %p85, %p86
      %p89 = scmp.ne.s32.totalorder %s72, %s88
      %p90 = scmp.eq.s32.totalorder %s17, 0
      %p91 = por %p89, %p90
      %p92 = scmp.le.s32.totalorder 1, %s11
      %p93 = scmp.lt.s32.totalorder %s11, 9
      %p94 = pnand %p92, %p93
      %p95 = pneg %p94
      // Predicated region
      $region9: #{_lambda_.1} parent=5 // pred_check
        _
      $region10: #{_lambda_.1} parent=5 // pred_check_branch
        %97 = sbr.rel (%p94) target = $region12
      $region11: #{_lambda_.1} parent=5 // pred_region
        %s98 = ssub.s32 %s11, 1
        // Predicated region
        $region13: #{_lambda_.1} parent=11 // pred_check
          %p99 = pneg %p58
        $region14: #{_lambda_.1} parent=11 // pred_check_branch
          %101 = sbr.rel (%p99) target = $region16
        $region15: #{_lambda_.1} parent=11 // pred_region
          _
        $region16: #{_lambda_.1} parent=11 // pred_fallthru
          _
      $region12: #{_lambda_.1} parent=5 // pred_fallthru
        _
      %p102 = scmp.lt.s32.totalorder %s11, 8
      // Predicated region
      $region17: #{_lambda_.1} parent=5 // pred_check
        %p103 = pneg %p102
      $region18: #{_lambda_.1} parent=5 // pred_check_branch
        %105 = sbr.rel (%p103) target = $region20
      $region19: #{_lambda_.1} parent=5 // pred_region
        // Predicated region
        $region21: #{_lambda_.1} parent=19 // pred_check
          %p106 = pneg %p31
        $region22: #{_lambda_.1} parent=19 // pred_check_branch
          %108 = sbr.rel (%p106) target = $region24
        $region23: #{_lambda_.1} parent=19 // pred_region
          %s109 = smul.u32 32, %s11
          %p110 = scmp.lt.s32.totalorder %s109, 255
          %s111 = scalar_select %p110, %s109, 255
          %s112 = smul.addr %s111, 4
          %s113 = scalar_lea.vmem %s0, %s112
          %s114 = smul.u32 32, %s11
        $region24: #{_lambda_.1} parent=19 // pred_fallthru
          _
      $region20: #{_lambda_.1} parent=5 // pred_fallthru
        _
      %p115 = scmp.le.s32.totalorder 1, %s11
      %p116 = scmp.lt.s32.totalorder %s11, 9
      %p117 = pnand %p115, %p116
      %p118 = pneg %p117
      // Predicated region
      $region25: #{_lambda_.1} parent=5 // pred_check
        _
      $region26: #{_lambda_.1} parent=5 // pred_check_branch
        %120 = sbr.rel (%p117) target = $region28
      $region27: #{_lambda_.1} parent=5 // pred_region
        %s121 = ssub.s32 %s11, 1
        %s122 = smul.u32 32, %s16
        %p123 = scmp.lt.s32.totalorder %s122, 255
        %s124 = scalar_select %p123, %s122, 255
        %s125 = smul.addr %s124, 4
        %s126 = scalar_lea.vmem %s0, %s125
        %p127 = pneg %p37
        %p128 = pneg %p34
        %p129 = pneg %p58
        %p130 = pneg %p55
        %p131 = pneg %p84
        %p132 = pneg %p81
        %s133 = sand.u32 %s71, 1
        %s134 = scalar_lea.sflag [#allocation3], %s133
        %s135 = sand.u32 %s71, 1
        %s136 = smul.addr %s135, 256
        %s137 = scalar_lea.vmem [#allocation2], %s136
        %s138 = smul.u32 32, %s16
        %p139 = scmp.lt.s32.totalorder %s138, 255
        %s140 = scalar_select %p139, %s138, 255
        %s141 = smul.addr %s140, 4
        %s142 = scalar_lea.vmem %s0, %s141
        %s143 = smul.u32 32, %s16
        %s144 = smul.u32 32, %s16
        %v146 = vld [vmem:[%s142] sm:$0xf]
        %v147 = vld [vmem:[%s142 + $0x4] sm:$0xf]
        %v148 = vld [vmem:[%s142 + $0x8] sm:$0xf]
        %v149 = vld [vmem:[%s142 + $0xc] sm:$0xf]
        %v150 = vld [vmem:[%s142 + $0x10] sm:$0xf]
        %v151 = vld [vmem:[%s142 + $0x14] sm:$0xf]
        %v152 = vld [vmem:[%s142 + $0x18] sm:$0xf]
        %v153 = vld [vmem:[%s142 + $0x1c] sm:$0xf]
        %v154 = vld [vmem:[%s142 + $0x20] sm:$0xf]
        %v155 = vld [vmem:[%s142 + $0x24] sm:$0xf]
        %v156 = vld [vmem:[%s142 + $0x28] sm:$0xf]
        %v157 = vld [vmem:[%s142 + $0x2c] sm:$0xf]
        %v158 = vld [vmem:[%s142 + $0x30] sm:$0xf]
        %v159 = vld [vmem:[%s142 + $0x34] sm:$0xf]
        %v160 = vld [vmem:[%s142 + $0x38] sm:$0xf]
        %v161 = vld [vmem:[%s142 + $0x3c] sm:$0xf]
        %v162 = vld [vmem:[%s142 + $0x40] sm:$0xf]
        %v163 = vld [vmem:[%s142 + $0x44] sm:$0xf]
        %v164 = vld [vmem:[%s142 + $0x48] sm:$0xf]
        %v165 = vld [vmem:[%s142 + $0x4c] sm:$0xf]
        %v166 = vld [vmem:[%s142 + $0x50] sm:$0xf]
        %v167 = vld [vmem:[%s142 + $0x54] sm:$0xf]
        %v168 = vld [vmem:[%s142 + $0x58] sm:$0xf]
        %v169 = vld [vmem:[%s142 + $0x5c] sm:$0xf]
        %v170 = vld [vmem:[%s142 + $0x60] sm:$0xf]
        %v171 = vld [vmem:[%s142 + $0x64] sm:$0xf]
        %v172 = vld [vmem:[%s142 + $0x68] sm:$0xf]
        %v173 = vld [vmem:[%s142 + $0x6c] sm:$0xf]
        %v174 = vld [vmem:[%s142 + $0x70] sm:$0xf]
        %v175 = vld [vmem:[%s142 + $0x74] sm:$0xf]
        %v176 = vld [vmem:[%s142 + $0x78] sm:$0xf]
        %v177 = vld [vmem:[%s142 + $0x7c] sm:$0xf]
        %v178 = vld [vmem:[%s1] sm:$0xf]
        %v179 = vld [vmem:[%s1 + $0x4] sm:$0xf]
        %v180 = vld [vmem:[%s1 + $0x8] sm:$0xf]
        %v181 = vld [vmem:[%s1 + $0xc] sm:$0xf]
        %v182 = vld [vmem:[%s1 + $0x10] sm:$0xf]
        %v183 = vld [vmem:[%s1 + $0x14] sm:$0xf]
        %v184 = vld [vmem:[%s1 + $0x18] sm:$0xf]
        %v185 = vld [vmem:[%s1 + $0x1c] sm:$0xf]
        %v186 = vld [vmem:[%s1 + $0x20] sm:$0xf]
        %v187 = vld [vmem:[%s1 + $0x24] sm:$0xf]
        %v188 = vld [vmem:[%s1 + $0x28] sm:$0xf]
        %v189 = vld [vmem:[%s1 + $0x2c] sm:$0xf]
        %v190 = vld [vmem:[%s1 + $0x30] sm:$0xf]
        %v191 = vld [vmem:[%s1 + $0x34] sm:$0xf]
        %v192 = vld [vmem:[%s1 + $0x38] sm:$0xf]
        %v193 = vld [vmem:[%s1 + $0x3c] sm:$0xf]
        %v226 = vunpack.c.l.b16 %v146
        %v227 = vunpack.c.l.b16 %v147
        %v228 = vunpack.c.l.b16 %v148
        %v229 = vunpack.c.l.b16 %v149
        %v230 = vunpack.c.l.b16 %v150
        %v231 = vunpack.c.l.b16 %v151
        %v232 = vunpack.c.l.b16 %v152
        %v233 = vunpack.c.l.b16 %v153
        %v234 = vunpack.c.l.b16 %v154
        %v235 = vunpack.c.l.b16 %v155
        %v236 = vunpack.c.l.b16 %v156
        %v237 = vunpack.c.l.b16 %v157
        %v238 = vunpack.c.l.b16 %v158
        %v239 = vunpack.c.l.b16 %v159
        %v240 = vunpack.c.l.b16 %v160
        %v241 = vunpack.c.l.b16 %v161
        %v242 = vunpack.c.l.b16 %v162
        %v243 = vunpack.c.l.b16 %v163
        %v244 = vunpack.c.l.b16 %v164
        %v245 = vunpack.c.l.b16 %v165
        %v246 = vunpack.c.l.b16 %v166
        %v247 = vunpack.c.l.b16 %v167
        %v248 = vunpack.c.l.b16 %v168
        %v249 = vunpack.c.l.b16 %v169
        %v250 = vunpack.c.l.b16 %v170
        %v251 = vunpack.c.l.b16 %v171
        %v252 = vunpack.c.l.b16 %v172
        %v253 = vunpack.c.l.b16 %v173
        %v254 = vunpack.c.l.b16 %v174
        %v255 = vunpack.c.l.b16 %v175
        %v256 = vunpack.c.l.b16 %v176
        %v257 = vunpack.c.l.b16 %v177
        %v258 = vpack.c.b16 %v227, %v226
        %v259 = vpack.c.b16 %v229, %v228
        %v260 = vpack.c.b16 %v231, %v230
        %v261 = vpack.c.b16 %v233, %v232
        %v262 = vpack.c.b16 %v235, %v234
        %v263 = vpack.c.b16 %v237, %v236
        %v264 = vpack.c.b16 %v239, %v238
        %v265 = vpack.c.b16 %v241, %v240
        %v266 = vpack.c.b16 %v243, %v242
        %v267 = vpack.c.b16 %v245, %v244
        %v268 = vpack.c.b16 %v247, %v246
        %v269 = vpack.c.b16 %v249, %v248
        %v270 = vpack.c.b16 %v251, %v250
        %v271 = vpack.c.b16 %v253, %v252
        %v272 = vpack.c.b16 %v255, %v254
        %v273 = vpack.c.b16 %v257, %v256
        %v306 = vunpack.c.l.b16 %v178
        %v307 = vunpack.c.l.b16 %v179
        %v308 = vunpack.c.l.b16 %v180
        %v309 = vunpack.c.l.b16 %v181
        %v310 = vunpack.c.l.b16 %v182
        %v311 = vunpack.c.l.b16 %v183
        %v312 = vunpack.c.l.b16 %v184
        %v313 = vunpack.c.l.b16 %v185
        %v314 = vunpack.c.l.b16 %v186
        %v315 = vunpack.c.l.b16 %v187
        %v316 = vunpack.c.l.b16 %v188
        %v317 = vunpack.c.l.b16 %v189
        %v318 = vunpack.c.l.b16 %v190
        %v319 = vunpack.c.l.b16 %v191
        %v320 = vunpack.c.l.b16 %v192
        %v321 = vunpack.c.l.b16 %v193
        %v322 = vpack.c.b16 %v307, %v306
        %v323 = vpack.c.b16 %v309, %v308
        %v324 = vpack.c.b16 %v311, %v310
        %v325 = vpack.c.b16 %v313, %v312
        %v326 = vpack.c.b16 %v315, %v314
        %v327 = vpack.c.b16 %v317, %v316
        %v328 = vpack.c.b16 %v319, %v318
        %v329 = vpack.c.b16 %v321, %v320
        %338 = vmatprep.subr.bf16.mxu0 0
        %339 = vmatpush1.bf16.msra.mxu0 %v322
        %340 = vmatprep.subr.bf16.mxu0 0
        %341 = vmatpush1.bf16.msra.mxu0 %v323
        %342 = vmatprep.subr.bf16.mxu0 0
        %343 = vmatpush1.bf16.msra.mxu0 %v324
        %344 = vmatprep.subr.bf16.mxu0 0
        %345 = vmatpush1.bf16.msra.mxu0 %v325
        %346 = vmatprep.subr.bf16.mxu0 0
        %347 = vmatpush1.bf16.msra.mxu0 %v326
        %348 = vmatprep.subr.bf16.mxu0 0
        %349 = vmatpush1.bf16.msra.mxu0 %v327
        %350 = vmatprep.subr.bf16.mxu0 0
        %351 = vmatpush1.bf16.msra.mxu0 %v328
        %352 = vmatprep.subr.bf16.mxu0 0
        %353 = vmatpush1.bf16.msra.mxu0 %v329
        %354 = vmatprep.subr.bf16.mxu0 0
        %355 = vmatpush1.bf16.msra.mxu0 0
        %356 = vmatprep.subr.bf16.mxu0 0
        %357 = vmatpush1.bf16.msra.mxu0 0
        %358 = vmatprep.subr.bf16.mxu0 0
        %359 = vmatpush1.bf16.msra.mxu0 0
        %360 = vmatprep.subr.bf16.mxu0 0
        %361 = vmatpush1.bf16.msra.mxu0 0
        %362 = vmatprep.subr.bf16.mxu0 0
        %363 = vmatpush1.bf16.msra.mxu0 0
        %364 = vmatprep.subr.bf16.mxu0 0
        %365 = vmatpush1.bf16.msra.mxu0 0
        %366 = vmatprep.subr.bf16.mxu0 0
        %367 = vmatpush1.bf16.msra.mxu0 0
        %368 = vmatprep.subr.bf16.mxu0 0
        %369 = vmatpush1.bf16.msra.mxu0 0
        %370 = vmatprep.mubr.bf16.mxu0 0
        %371 = vmatmul.mubr.bf16.gmra.mrb[0].mxu0 %v258
        %v372 = vpop.f32.mrb[0].mxu0
        %v373 = vadd.f32 0.0, %v372
        %v374 = vpop.f32.mrb[0].mxu0
        %v375 = vpop.f32.mrb[0].mxu0
        %v376 = vadd.f32 0.0, %v375
        %v377 = vpop.f32.mrb[0].mxu0
        %378 = vmatprep.mubr.bf16.mxu0 0
        %379 = vmatmul.mubr.bf16.gmra.mrb[0].mxu0 %v259
        %v380 = vpop.f32.mrb[0].mxu0
        %v381 = vadd.f32 0.0, %v380
        %v382 = vpop.f32.mrb[0].mxu0
        %v383 = vpop.f32.mrb[0].mxu0
        %v384 = vadd.f32 0.0, %v383
        %v385 = vpop.f32.mrb[0].mxu0
        %386 = vmatprep.mubr.bf16.mxu0 0
        %387 = vmatmul.mubr.bf16.gmra.mrb[0].mxu0 %v260
        %v388 = vpop.f32.mrb[0].mxu0
        %v389 = vadd.f32 0.0, %v388
        %v390 = vpop.f32.mrb[0].mxu0
        %v391 = vpop.f32.mrb[0].mxu0
        %v392 = vadd.f32 0.0, %v391
        %v393 = vpop.f32.mrb[0].mxu0
        %394 = vmatprep.mubr.bf16.mxu0 0
        %395 = vmatmul.mubr.bf16.gmra.mrb[0].mxu0 %v261
        %v396 = vpop.f32.mrb[0].mxu0
        %v397 = vadd.f32 0.0, %v396
        %v398 = vpop.f32.mrb[0].mxu0
        %v399 = vpop.f32.mrb[0].mxu0
        %v400 = vadd.f32 0.0, %v399
        %v401 = vpop.f32.mrb[0].mxu0
        %402 = vmatprep.mubr.bf16.mxu0 0
        %403 = vmatmul.mubr.bf16.gmra.mrb[0].mxu0 %v262
        %v404 = vpop.f32.mrb[0].mxu0
        %v405 = vadd.f32 0.0, %v404
        %v406 = vpop.f32.mrb[0].mxu0
        %v407 = vpop.f32.mrb[0].mxu0
        %v408 = vadd.f32 0.0, %v407
        %v409 = vpop.f32.mrb[0].mxu0
        %410 = vmatprep.mubr.bf16.mxu0 0
        %411 = vmatmul.mubr.bf16.gmra.mrb[0].mxu0 %v263
        %v412 = vpop.f32.mrb[0].mxu0
        %v413 = vadd.f32 0.0, %v412
        %v414 = vpop.f32.mrb[0].mxu0
        %v415 = vpop.f32.mrb[0].mxu0
        %v416 = vadd.f32 0.0, %v415
        %v417 = vpop.f32.mrb[0].mxu0
        %418 = vmatprep.mubr.bf16.mxu0 0
        %419 = vmatmul.mubr.bf16.gmra.mrb[0].mxu0 %v264
        %v420 = vpop.f32.mrb[0].mxu0
        %v421 = vadd.f32 0.0, %v420
        %v422 = vpop.f32.mrb[0].mxu0
        %v423 = vpop.f32.mrb[0].mxu0
        %v424 = vadd.f32 0.0, %v423
        %v425 = vpop.f32.mrb[0].mxu0
        %426 = vmatprep.mubr.bf16.mxu0 0
        %427 = vmatmul.mubr.bf16.gmra.mrb[0].mxu0 %v265
        %v428 = vpop.f32.mrb[0].mxu0
        %v429 = vadd.f32 0.0, %v428
        %v430 = vpop.f32.mrb[0].mxu0
        %v431 = vpop.f32.mrb[0].mxu0
        %v432 = vadd.f32 0.0, %v431
        %v433 = vpop.f32.mrb[0].mxu0
        %434 = vmatprep.mubr.bf16.mxu0 0
        %435 = vmatmul.mubr.bf16.gmra.mrb[0].mxu0 %v266
        %v436 = vpop.f32.mrb[0].mxu0
        %v437 = vadd.f32 0.0, %v436
        %v438 = vpop.f32.mrb[0].mxu0
        %v439 = vpop.f32.mrb[0].mxu0
        %v440 = vadd.f32 0.0, %v439
        %v441 = vpop.f32.mrb[0].mxu0
        %442 = vmatprep.mubr.bf16.mxu0 0
        %443 = vmatmul.mubr.bf16.gmra.mrb[0].mxu0 %v267
        %v444 = vpop.f32.mrb[0].mxu0
        %v445 = vadd.f32 0.0, %v444
        %v446 = vpop.f32.mrb[0].mxu0
        %v447 = vpop.f32.mrb[0].mxu0
        %v448 = vadd.f32 0.0, %v447
        %v449 = vpop.f32.mrb[0].mxu0
        %450 = vmatprep.mubr.bf16.mxu0 0
        %451 = vmatmul.mubr.bf16.gmra.mrb[0].mxu0 %v268
        %v452 = vpop.f32.mrb[0].mxu0
        %v453 = vadd.f32 0.0, %v452
        %v454 = vpop.f32.mrb[0].mxu0
        %v455 = vpop.f32.mrb[0].mxu0
        %v456 = vadd.f32 0.0, %v455
        %v457 = vpop.f32.mrb[0].mxu0
        %458 = vmatprep.mubr.bf16.mxu0 0
        %459 = vmatmul.mubr.bf16.gmra.mrb[0].mxu0 %v269
        %v460 = vpop.f32.mrb[0].mxu0
        %v461 = vadd.f32 0.0, %v460
        %v462 = vpop.f32.mrb[0].mxu0
        %v463 = vpop.f32.mrb[0].mxu0
        %v464 = vadd.f32 0.0, %v463
        %v465 = vpop.f32.mrb[0].mxu0
        %466 = vmatprep.mubr.bf16.mxu0 0
        %467 = vmatmul.mubr.bf16.gmra.mrb[0].mxu0 %v270
        %v468 = vpop.f32.mrb[0].mxu0
        %v469 = vadd.f32 0.0, %v468
        %v470 = vpop.f32.mrb[0].mxu0
        %v471 = vpop.f32.mrb[0].mxu0
        %v472 = vadd.f32 0.0, %v471
        %v473 = vpop.f32.mrb[0].mxu0
        %474 = vmatprep.mubr.bf16.mxu0 0
        %475 = vmatmul.mubr.bf16.gmra.mrb[0].mxu0 %v271
        %v476 = vpop.f32.mrb[0].mxu0
        %v477 = vadd.f32 0.0, %v476
        %v478 = vpop.f32.mrb[0].mxu0
        %v479 = vpop.f32.mrb[0].mxu0
        %v480 = vadd.f32 0.0, %v479
        %v481 = vpop.f32.mrb[0].mxu0
        %482 = vmatprep.mubr.bf16.mxu0 0
        %483 = vmatmul.mubr.bf16.gmra.mrb[0].mxu0 %v272
        %v484 = vpop.f32.mrb[0].mxu0
        %v485 = vadd.f32 0.0, %v484
        %v486 = vpop.f32.mrb[0].mxu0
        %v487 = vpop.f32.mrb[0].mxu0
        %v488 = vadd.f32 0.0, %v487
        %v489 = vpop.f32.mrb[0].mxu0
        %490 = vmatprep.mubr.bf16.mxu0 0
        %491 = vmatmul.mubr.bf16.gmra.mrb[0].mxu0 %v273
        %v492 = vpop.f32.mrb[0].mxu0
        %v493 = vadd.f32 0.0, %v492
        %v494 = vpop.f32.mrb[0].mxu0
        %v495 = vpop.f32.mrb[0].mxu0
        %v496 = vadd.f32 0.0, %v495
        %v497 = vpop.f32.mrb[0].mxu0
        %498 = vdwg.mxu0
        %499 = vst [vmem:[%s137] sm:$0xff] %v373
        %500 = vst [vmem:[%s137 + $0x8] sm:$0xff] %v376
        %501 = vst [vmem:[%s137 + $0x10] sm:$0xff] %v381
        %502 = vst [vmem:[%s137 + $0x18] sm:$0xff] %v384
        %503 = vst [vmem:[%s137 + $0x20] sm:$0xff] %v389
        %504 = vst [vmem:[%s137 + $0x28] sm:$0xff] %v392
        %505 = vst [vmem:[%s137 + $0x30] sm:$0xff] %v397
        %506 = vst [vmem:[%s137 + $0x38] sm:$0xff] %v400
        %507 = vst [vmem:[%s137 + $0x40] sm:$0xff] %v405
        %508 = vst [vmem:[%s137 + $0x48] sm:$0xff] %v408
        %509 = vst [vmem:[%s137 + $0x50] sm:$0xff] %v413
        %510 = vst [vmem:[%s137 + $0x58] sm:$0xff] %v416
        %511 = vst [vmem:[%s137 + $0x60] sm:$0xff] %v421
        %512 = vst [vmem:[%s137 + $0x68] sm:$0xff] %v424
        %513 = vst [vmem:[%s137 + $0x70] sm:$0xff] %v429
        %514 = vst [vmem:[%s137 + $0x78] sm:$0xff] %v432
        %515 = vst [vmem:[%s137 + $0x80] sm:$0xff] %v437
        %516 = vst [vmem:[%s137 + $0x88] sm:$0xff] %v440
        %517 = vst [vmem:[%s137 + $0x90] sm:$0xff] %v445
        %518 = vst [vmem:[%s137 + $0x98] sm:$0xff] %v448
        %519 = vst [vmem:[%s137 + $0xa0] sm:$0xff] %v453
        %520 = vst [vmem:[%s137 + $0xa8] sm:$0xff] %v456
        %521 = vst [vmem:[%s137 + $0xb0] sm:$0xff] %v461
        %522 = vst [vmem:[%s137 + $0xb8] sm:$0xff] %v464
        %523 = vst [vmem:[%s137 + $0xc0] sm:$0xff] %v469
        %524 = vst [vmem:[%s137 + $0xc8] sm:$0xff] %v472
        %525 = vst [vmem:[%s137 + $0xd0] sm:$0xff] %v477
        %526 = vst [vmem:[%s137 + $0xd8] sm:$0xff] %v480
        %527 = vst [vmem:[%s137 + $0xe0] sm:$0xff] %v485
        %528 = vst [vmem:[%s137 + $0xe8] sm:$0xff] %v488
        %529 = vst [vmem:[%s137 + $0xf0] sm:$0xff] %v493
        %530 = vst [vmem:[%s137 + $0xf8] sm:$0xff] %v496
        %s531 = sand.u32 %s71, 1
        %s532 = scalar_lea.sflag [#allocation3], %s531
        %s533 = sand.u32 %s71, 1
        %s534 = smul.addr %s533, 256
        %s535 = scalar_lea.vmem [#allocation2], %s534
        // Predicated region
        $region29: #{_lambda_.1} parent=27 // pred_check
          %p536 = pneg %p81
        $region30: #{_lambda_.1} parent=27 // pred_check_branch
          %538 = sbr.rel (%p536) target = $region32
        $region31: #{_lambda_.1} parent=27 // pred_region
          %s539 = smul.u32 32, %s16
          %s541 = ssub.s32 4096, 4096
          %542 = vsyncadd %s532, %s541
          %s543 = smul.addr %s539, 128
          %s544 = scalar_lea.hbm %s2, %s543
          %s545 = sshll.u32 %s535, 4
          %s546 = int_to_ptr.vmem [resolvable:$true] %s545
          %551 = dma.vmem_to_hbm [thread:$0]  %s546, 4096, %s544, %s532, 128, 128, 8
        $region32: #{_lambda_.1} parent=27 // pred_fallthru
          _
      $region28: #{_lambda_.1} parent=5 // pred_fallthru
        _
      %p552 = scmp.le.s32.totalorder 2, %s11
      // Predicated region
      $region33: #{_lambda_.1} parent=5 // pred_check
        %p553 = pneg %p552
      $region34: #{_lambda_.1} parent=5 // pred_check_branch
        %555 = sbr.rel (%p553) target = $region36
      $region35: #{_lambda_.1} parent=5 // pred_region
        %s556 = ssub.s32 %s11, 2
        // Predicated region
        $region37: #{_lambda_.1} parent=35 // pred_check
          %p557 = pneg %p87
        $region38: #{_lambda_.1} parent=35 // pred_check_branch
          %559 = sbr.rel (%p557) target = $region40
        $region39: #{_lambda_.1} parent=35 // pred_region
          %s560 = sand.u32 %s72, 1
          %s561 = scalar_lea.sflag [#allocation3], %s560
          %s562 = sand.u32 %s72, 1
          %s563 = smul.addr %s562, 256
          %s564 = scalar_lea.vmem [#allocation2], %s563
          %565 = dma.done %s561, 4096
        $region40: #{_lambda_.1} parent=35 // pred_fallthru
          _
      $region36: #{_lambda_.1} parent=5 // pred_fallthru
        _
    $region6: #{_lambda_.1} parent=1 // loop_footer
      %s15 = sadd.s32 1, %s11
    $region7: #{_lambda_.1} parent=1 // loop_footer_branch
      %10 = sbr.rel target = $region3
    $region8: #{_lambda_.1} parent=1 // loop_exit
      _
    %566 = vsyncpa [#allocation3], 1
    %s567 = scalar_lea.sflag [#allocation3], 1
    %568 = vsyncpa %s567, 1

</llo_original>
